<compile_context>
chip_gen: v7x
topology: tpu7x:2x2x1
jax: 0.10.0
libtpu: 0.0.40
codegen_flags: <defaults>
</compile_context>

<pallas_src>
import jax
import jax.numpy as jnp
from jax import lax
from jax.experimental import pallas as pl
from jax.experimental.pallas import tpu as pltpu

SUBLANE = 8          # f32 sublane multiple (class dim 6 -> 8)
LANE = 128           # lane width (batch axis of the transposed output)
MAX_BATCH_TILE = 1024


def _round_up(x, m):
    return ((x + m - 1) // m) * m


def classifier_kernel(x_ref, w1_ref, b1_ref, w2_ref, b2_ref, out_ref):
    # In-kernel cast: hides under DMA/MXU, halves x-related HBM traffic vs a
    # wrapper-side cast pass.
    x = x_ref[...].astype(jnp.bfloat16)
    # fc1: x @ W1^T  (contract on W1's second axis -> no weight transpose).
    h = lax.dot_general(
        x, w1_ref[...],
        dimension_numbers=(((1,), (1,)), ((), ())),
        preferred_element_type=jnp.float32,
    )
    # bias + ReLU in f32 on the VPU.
    h = jnp.maximum(h + b1_ref[...], 0.0)
    # fc2, transposed & narrow: (n_pad, hidden) x (tile, hidden) -> (n_pad, tile).
    # Keeps the 128-lane axis on the batch dimension (lane-dense stores) and
    # avoids padding num_classes up to 128.
    o = lax.dot_general(
        w2_ref[...], h.astype(w2_ref.dtype),
        dimension_numbers=(((1,), (1,)), ((), ())),
        preferred_element_type=jnp.float32,
    )
    out_ref[...] = (o + b2_ref[...]).astype(out_ref.dtype)


def prepare_params(w1, b1, w2, b2):
    """One-time parameter prep (at init time, not per forward call).

    w1: (hidden, in)  b1: (hidden,)  w2: (classes, hidden)  b2: (classes,)
    Weights -> bf16; fc2 weight/bias padded only to the f32 sublane multiple (8).
    """
    hidden, in_features = w1.shape
    num_classes = w2.shape[0]
    n_pad = _round_up(num_classes, SUBLANE)            # 6 -> 8
    w2_p = jnp.zeros((n_pad, hidden), w2.dtype).at[:num_classes].set(w2)
    b2_p = jnp.zeros((n_pad,), b2.dtype).at[:num_classes].set(b2)
    return dict(
        w1=w1.astype(jnp.bfloat16),
        b1=b1.reshape(1, hidden).astype(jnp.float32),
        w2=w2_p.astype(jnp.bfloat16),
        b2=b2_p.reshape(n_pad, 1).astype(jnp.float32),
        num_classes=num_classes,
        n_pad=n_pad,
        hidden=hidden,
        in_features=in_features,
    )


def _pick_batch_tile(batch):
    """Batch tile: full batch if small; else a multiple of 128 (lane-dense
    transposed output), capped at MAX_BATCH_TILE, and sized so the grid has
    >= 2 steps (keeps both v7x TensorCores busy)."""
    if batch <= LANE:
        return batch                                  # single full-array block
    half = -(-batch // 2)                             # ceil(batch / 2)
    return min(MAX_BATCH_TILE, _round_up(half, LANE))


def classifier_forward(x, params):
    """x: (B, in_features) float32. Returns (B, num_classes) float32 logits."""
    B, K = x.shape
    hidden = params["hidden"]
    n_pad = params["n_pad"]
    num_classes = params["num_classes"]

    tile = _pick_batch_tile(B)
    grid = (pl.cdiv(B, tile),)   # ragged edge block is masked by Pallas;
                                 # garbage rows never reach valid output columns.

    out_t = pl.pallas_call(
        classifier_kernel,
        out_shape=jax.ShapeDtypeStruct((n_pad, B), jnp.float32),
        grid=grid,
        in_specs=[
            # batch-tiled activations (f32; cast to bf16 inside the kernel)
            pl.BlockSpec((tile, K), lambda i: (i, 0)),
            # weights/biases: constant index_map -> DMA'd once, VMEM-resident
            pl.BlockSpec((hidden, K), lambda i: (0, 0)),
            pl.BlockSpec((1, hidden), lambda i: (0, 0)),
            pl.BlockSpec((n_pad, hidden), lambda i: (0, 0)),
            pl.BlockSpec((n_pad, 1), lambda i: (0, 0)),
        ],
        # transposed narrow output: lanes = batch (dense), sublanes = classes
        out_specs=pl.BlockSpec((n_pad, tile), lambda i: (0, i)),
        compiler_params=pltpu.CompilerParams(
            # independent batch tiles -> shard across v7x's 2 TensorCores
            dimension_semantics=("parallel",),
        ),
    )(x, params["w1"], params["b1"], params["w2"], params["b2"])

    # Strip class padding and transpose back (tiny: 8 x B f32).
    return out_t[:num_classes, :].T


def reference_forward(x, w1, b1, w2, b2):
    h = jnp.maximum(x @ w1.T + b1, 0.0)
    return h @ w2.T + b2


if __name__ == "__main__":
    # Small shapes consistent with the module (hidden_size=256, HAR: 6 classes).
    # batch=200 is deliberately NOT a multiple of the 128-row tile so the
    # ragged-edge masking path is exercised (grid = 2 tiles).
    batch = 200
    input_size = 64
    hidden_size = 256
    num_classes = 6

    key = jax.random.PRNGKey(0)
    kx, k1, k2, k3, k4 = jax.random.split(key, 5)

    x = jax.random.normal(kx, (batch, input_size), dtype=jnp.float32)
    # nn.Linear-style uniform(-1/sqrt(fan_in), 1/sqrt(fan_in)) init.
    lim1 = 1.0 / jnp.sqrt(input_size)
    w1 = jax.random.uniform(k1, (hidden_size, input_size), jnp.float32, -lim1, lim1)
    b1 = jax.random.uniform(k2, (hidden_size,), jnp.float32, -lim1, lim1)
    lim2 = 1.0 / jnp.sqrt(hidden_size)
    w2 = jax.random.uniform(k3, (num_classes, hidden_size), jnp.float32, -lim2, lim2)
    b2 = jax.random.uniform(k4, (num_classes,), jnp.float32, -lim2, lim2)

    params = prepare_params(w1, b1, w2, b2)   # one-time, outside the forward
    out = classifier_forward(x, params)
    out = jax.block_until_ready(out)

    ref = reference_forward(x, w1, b1, w2, b2)
    assert out.shape == (batch, num_classes), out.shape
    # bf16 matmuls with f32 accumulation -> loosened tolerance vs f32 reference.
    assert jnp.allclose(out, ref, atol=3e-2, rtol=3e-2), "mismatch vs reference"

    # TODO(synk): nn.Dropout(0.5) is declared in the module but unused in
    # forward(); if training-mode dropout is ever needed, add a pltpu.prng path.
    print("KERNEL_OK")
</pallas_src>

<mosaic_0001>
module attributes {stable_mosaic.version = 11 : i64} {
  func.func @classifier_kernel(%arg0: i32, %arg1: memref<128x64xf32, #tpu.memory_space<vmem>>, %arg2: memref<256x64xbf16, #tpu.memory_space<vmem>>, %arg3: memref<1x256xf32, #tpu.memory_space<vmem>>, %arg4: memref<8x256xbf16, #tpu.memory_space<vmem>>, %arg5: memref<8x1xf32, #tpu.memory_space<vmem>>, %arg6: memref<8x128xf32, #tpu.memory_space<vmem>>) attributes {dimension_semantics = [#tpu.dimension_semantics<parallel>], iteration_bounds = array<i64: 2>, scalar_prefetch = 0 : i64, scratch_operands = 0 : i64, tpu.core_type = #tpu.core_type<tc>, window_params = [{transform_indices = @transform_0, window_bounds = array<i64: 128, 64>}, {pipeline_mode = #tpu.pipeline_mode<synchronous>, transform_indices = @transform_1, window_bounds = array<i64: 256, 64>}, {pipeline_mode = #tpu.pipeline_mode<synchronous>, transform_indices = @transform_2, window_bounds = array<i64: 1, 256>}, {pipeline_mode = #tpu.pipeline_mode<synchronous>, transform_indices = @transform_3, window_bounds = array<i64: 8, 256>}, {pipeline_mode = #tpu.pipeline_mode<synchronous>, transform_indices = @transform_4, window_bounds = array<i64: 8, 1>}, {transform_indices = @transform_5, window_bounds = array<i64: 8, 128>}]} {
    %c0 = arith.constant 0 : index
    %c0_0 = arith.constant 0 : index
    %0 = vector.load %arg1[%c0, %c0_0] : memref<128x64xf32, #tpu.memory_space<vmem>>, vector<128x64xf32>
    %1 = arith.truncf %0 : vector<128x64xf32> to vector<128x64xbf16>
    %c0_1 = arith.constant 0 : index
    %c0_2 = arith.constant 0 : index
    %2 = vector.load %arg2[%c0_1, %c0_2] : memref<256x64xbf16, #tpu.memory_space<vmem>>, vector<256x64xbf16>
    %cst = arith.constant dense<0.000000e+00> : vector<128x256xf32>
    %3 = tpu.matmul %1, %2, %cst {dimension_numbers = #tpu.dot_dimension_numbers<[1], [1], [0], [0], [0, 0, 1, 0], [], []>} : vector<128x64xbf16>, vector<256x64xbf16>, vector<128x256xf32> -> vector<128x256xf32>
    %c0_3 = arith.constant 0 : index
    %c0_4 = arith.constant 0 : index
    %4 = vector.load %arg3[%c0_3, %c0_4] : memref<1x256xf32, #tpu.memory_space<vmem>>, vector<1x256xf32>
    %5 = vector.broadcast %4 : vector<1x256xf32> to vector<128x256xf32>
    %6 = arith.addf %3, %5 : vector<128x256xf32>
    %cst_5 = arith.constant 0.000000e+00 : f32
    %7 = vector.broadcast %cst_5 : f32 to vector<128x256xf32>
    %8 = arith.maximumf %6, %7 : vector<128x256xf32>
    %c0_6 = arith.constant 0 : index
    %c0_7 = arith.constant 0 : index
    %9 = vector.load %arg4[%c0_6, %c0_7] : memref<8x256xbf16, #tpu.memory_space<vmem>>, vector<8x256xbf16>
    %10 = arith.truncf %8 : vector<128x256xf32> to vector<128x256xbf16>
    %cst_8 = arith.constant dense<0.000000e+00> : vector<8x128xf32>
    %11 = tpu.matmul %9, %10, %cst_8 {dimension_numbers = #tpu.dot_dimension_numbers<[1], [1], [0], [0], [0, 0, 1, 0], [], []>} : vector<8x256xbf16>, vector<128x256xbf16>, vector<8x128xf32> -> vector<8x128xf32>
    %c0_9 = arith.constant 0 : index
    %c0_10 = arith.constant 0 : index
    %12 = vector.load %arg5[%c0_9, %c0_10] : memref<8x1xf32, #tpu.memory_space<vmem>>, vector<8x1xf32>
    %13 = vector.broadcast %12 : vector<8x1xf32> to vector<8x128xf32>
    %14 = arith.addf %11, %13 : vector<8x128xf32>
    %c0_11 = arith.constant 0 : index
    %c0_12 = arith.constant 0 : index
    %15 = vector.load %arg6[%c0_11, %c0_12] : memref<8x128xf32, #tpu.memory_space<vmem>>, vector<8x128xf32>
    tpu.vector_store %arg6[%c0_11, %c0_12], %14 {strides = array<i32>} : memref<8x128xf32, #tpu.memory_space<vmem>>, vector<8x128xf32>,
    return
  }
  func.func @transform_0(%arg0: i32) -> (i32, i32) {
    %c0_i32 = arith.constant 0 : i32
    %c0_i32_0 = arith.constant 0 : i32
    return %arg0, %c0_i32 : i32, i32
  }
  func.func @transform_1(%arg0: i32) -> (i32, i32) {
    %c0_i32 = arith.constant 0 : i32
    %c0_i32_0 = arith.constant 0 : i32
    %c0_i32_1 = arith.constant 0 : i32
    return %c0_i32, %c0_i32_0 : i32, i32
  }
  func.func @transform_2(%arg0: i32) -> (i32, i32) {
    %c0_i32 = arith.constant 0 : i32
    %c0_i32_0 = arith.constant 0 : i32
    %c0_i32_1 = arith.constant 0 : i32
    return %c0_i32, %c0_i32_0 : i32, i32
  }
  func.func @transform_3(%arg0: i32) -> (i32, i32) {
    %c0_i32 = arith.constant 0 : i32
    %c0_i32_0 = arith.constant 0 : i32
    %c0_i32_1 = arith.constant 0 : i32
    return %c0_i32, %c0_i32_0 : i32, i32
  }
  func.func @transform_4(%arg0: i32) -> (i32, i32) {
    %c0_i32 = arith.constant 0 : i32
    %c0_i32_0 = arith.constant 0 : i32
    %c0_i32_1 = arith.constant 0 : i32
    return %c0_i32, %c0_i32_0 : i32, i32
  }
  func.func @transform_5(%arg0: i32) -> (i32, i32) {
    %c0_i32 = arith.constant 0 : i32
    %c0_i32_0 = arith.constant 0 : i32
    return %c0_i32, %arg0 : i32, i32
  }
}

</mosaic_0001>

<llo_original>
// kernel: tpu_custom_call.1
$region0: #{tpu_custom_call.1}
  #allocation0 [shape = 'u32[]', space=smem, size = 0x4, offset = 0x4, fixed_abs, tag = 'smem constant byte address 0x4 - core index']
  #allocation1 [shape = 'u32[144,128]{1,0:T(1,128)}', space=vmem, size = 0x12000, scoped, tag = 'internal scratch']
  %s0 = inlined_call_operand.vmem [shape: f32[200,64], index: 0, kind: input, shape index: {}]
  %s1 = inlined_call_operand.vmem [shape: bf16[256,64], index: 1, kind: input, shape index: {}]
  %s2 = inlined_call_operand.vmem [shape: f32[1,256], index: 2, kind: input, shape index: {}]
  %s3 = inlined_call_operand.vmem [shape: bf16[8,256], index: 3, kind: input, shape index: {}]
  %s4 = inlined_call_operand.vmem [shape: f32[8,1], index: 4, kind: input, shape index: {}]
  %s5 = inlined_call_operand.hbm [shape: f32[8,200], index: 5, kind: output, shape index: {}]
  %s6 = sld [smem:[#allocation0]]
  $region53: #{tpu_custom_call.1} parent=0
    _
  %s8 = ssub.s32 1, %s6
  %s9 = scalar_select 0, %s8, %s6
  $region1: #{tpu_custom_call.1} parent=0
    #allocation2 [shape = 'u8[8192]{0}', space=vmem, size = 0x2000, scoped, tag = 'output window, operand 0']
    #allocation3 [shape = 's32[2]{0}', space=sflag, size = 0x8, scoped, tag = 'scoped memory for tpu_custom_call.1']
    %10 = vsyncpa [#allocation3], 0
    %s11 = scalar_lea.sflag [#allocation3], 1
    %12 = vsyncpa %s11, 0
    loop: start=0, step=1, limit=4
    $region2: #{tpu_custom_call.1} parent=1 // loop_pre_header
      _
    $region3: #{tpu_custom_call.1} parent=1 // loop_header
      %s14 = sphi 0, %s18
      %p15 = scmp.ge.s32.totalorder %s14, 4
      %s24 = sphi 0, %s26
      %s27 = sphi 0, %s24
      %s28 = sphi 0, %s27
      %s44 = sphi 0, %s28
      %s48 = sphi 0, %s48
      %s50 = sphi 0, %s48
      %s51 = sphi 0, %s50
      %s65 = sphi 0, %s51
      %s69 = sphi 0, %s69
      %s71 = sphi 0, %s69
      %s72 = sphi 0, %s71
      %s86 = sphi 0, %s72
      %s90 = sphi 0, %s90
      %s92 = sphi 0, %s90
      %s93 = sphi 0, %s92
      %s107 = sphi 0, %s93
      %s111 = sphi 0, %s111
      %s113 = sphi 0, %s111
      %s114 = sphi 0, %s113
      %s128 = sphi 0, %s114
      %s134 = sphi 0, %s136
      %s137 = sphi 0, %s134
      %s138 = sphi 0, %s137
      %s154 = sphi 0, %s138
    $region4: #{tpu_custom_call.1} parent=1 // loop_header_branch
      %17 = sbr.rel (%p15) target = $region8
    $region5: #{tpu_custom_call.1} parent=1 // loop_body
      %s19 = ssub.s32 %s14, 1
      %s20 = ssub.s32 %s14, 2
      %s21 = sadd.s32 %s14, 1
      %s22 = ssub.s32 %s14, %s21
      %p23 = scmp.eq.s32.totalorder %s22, 0
      %s25 = sadd.s32 %s24, 1
      %s26 = scalar_select %p23, %s24, %s25
      %p29 = pneg %p23
      %p30 = scmp.eq.s32.totalorder %s14, 1
      %p31 = por %p29, %p30
      %p32 = scmp.ne.s32.totalorder %s24, %s27
      %p33 = scmp.eq.s32.totalorder %s14, 0
      %p34 = por %p32, %p33
      %p35 = scmp.ne.s32.totalorder %s24, %s27
      %p36 = scmp.eq.s32.totalorder %s19, 1
      %p37 = por %p35, %p36
      %p38 = scmp.ne.s32.totalorder %s27, %s28
      %p39 = scmp.eq.s32.totalorder %s19, 0
      %p40 = por %p38, %p39
      %p41 = scmp.ne.s32.totalorder %s27, %s28
      %p42 = scmp.eq.s32.totalorder %s20, 1
      %p43 = por %p41, %p42
      %p45 = scmp.ne.s32.totalorder %s28, %s44
      %p46 = scmp.eq.s32.totalorder %s20, 0
      %p47 = por %p45, %p46
      %s49 = sadd.s32 %s48, 1
      %p52 = scmp.eq.s32.totalorder %s14, 1
      %p53 = scmp.ne.s32.totalorder %s48, %s50
      %p54 = scmp.eq.s32.totalorder %s14, 0
      %p55 = por %p53, %p54
      %p56 = scmp.ne.s32.totalorder %s48, %s50
      %p57 = scmp.eq.s32.totalorder %s19, 1
      %p58 = por %p56, %p57
      %p59 = scmp.ne.s32.totalorder %s50, %s51
      %p60 = scmp.eq.s32.totalorder %s19, 0
      %p61 = por %p59, %p60
      %p62 = scmp.ne.s32.totalorder %s50, %s51
      %p63 = scmp.eq.s32.totalorder %s20, 1
      %p64 = por %p62, %p63
      %p66 = scmp.ne.s32.totalorder %s51, %s65
      %p67 = scmp.eq.s32.totalorder %s20, 0
      %p68 = por %p66, %p67
      %s70 = sadd.s32 %s69, 1
      %p73 = scmp.eq.s32.totalorder %s14, 1
      %p74 = scmp.ne.s32.totalorder %s69, %s71
      %p75 = scmp.eq.s32.totalorder %s14, 0
      %p76 = por %p74, %p75
      %p77 = scmp.ne.s32.totalorder %s69, %s71
      %p78 = scmp.eq.s32.totalorder %s19, 1
      %p79 = por %p77, %p78
      %p80 = scmp.ne.s32.totalorder %s71, %s72
      %p81 = scmp.eq.s32.totalorder %s19, 0
      %p82 = por %p80, %p81
      %p83 = scmp.ne.s32.totalorder %s71, %s72
      %p84 = scmp.eq.s32.totalorder %s20, 1
      %p85 = por %p83, %p84
      %p87 = scmp.ne.s32.totalorder %s72, %s86
      %p88 = scmp.eq.s32.totalorder %s20, 0
      %p89 = por %p87, %p88
      %s91 = sadd.s32 %s90, 1
      %p94 = scmp.eq.s32.totalorder %s14, 1
      %p95 = scmp.ne.s32.totalorder %s90, %s92
      %p96 = scmp.eq.s32.totalorder %s14, 0
      %p97 = por %p95, %p96
      %p98 = scmp.ne.s32.totalorder %s90, %s92
      %p99 = scmp.eq.s32.totalorder %s19, 1
      %p100 = por %p98, %p99
      %p101 = scmp.ne.s32.totalorder %s92, %s93
      %p102 = scmp.eq.s32.totalorder %s19, 0
      %p103 = por %p101, %p102
      %p104 = scmp.ne.s32.totalorder %s92, %s93
      %p105 = scmp.eq.s32.totalorder %s20, 1
      %p106 = por %p104, %p105
      %p108 = scmp.ne.s32.totalorder %s93, %s107
      %p109 = scmp.eq.s32.totalorder %s20, 0
      %p110 = por %p108, %p109
      %s112 = sadd.s32 %s111, 1
      %p115 = scmp.eq.s32.totalorder %s14, 1
      %p116 = scmp.ne.s32.totalorder %s111, %s113
      %p117 = scmp.eq.s32.totalorder %s14, 0
      %p118 = por %p116, %p117
      %p119 = scmp.ne.s32.totalorder %s111, %s113
      %p120 = scmp.eq.s32.totalorder %s19, 1
      %p121 = por %p119, %p120
      %p122 = scmp.ne.s32.totalorder %s113, %s114
      %p123 = scmp.eq.s32.totalorder %s19, 0
      %p124 = por %p122, %p123
      %p125 = scmp.ne.s32.totalorder %s113, %s114
      %p126 = scmp.eq.s32.totalorder %s20, 1
      %p127 = por %p125, %p126
      %p129 = scmp.ne.s32.totalorder %s114, %s128
      %p130 = scmp.eq.s32.totalorder %s20, 0
      %p131 = por %p129, %p130
      %s132 = ssub.s32 %s14, %s21
      %p133 = scmp.eq.s32.totalorder %s132, 0
      %s135 = sadd.s32 %s134, 1
      %s136 = scalar_select %p133, %s134, %s135
      %p139 = pneg %p133
      %p140 = scmp.eq.s32.totalorder %s14, 1
      %p141 = por %p139, %p140
      %p142 = scmp.ne.s32.totalorder %s134, %s137
      %p143 = scmp.eq.s32.totalorder %s14, 0
      %p144 = por %p142, %p143
      %p145 = scmp.ne.s32.totalorder %s134, %s137
      %p146 = scmp.eq.s32.totalorder %s19, 1
      %p147 = por %p145, %p146
      %p148 = scmp.ne.s32.totalorder %s137, %s138
      %p149 = scmp.eq.s32.totalorder %s19, 0
      %p150 = por %p148, %p149
      %p151 = scmp.ne.s32.totalorder %s137, %s138
      %p152 = scmp.eq.s32.totalorder %s20, 1
      %p153 = por %p151, %p152
      %p155 = scmp.ne.s32.totalorder %s138, %s154
      %p156 = scmp.eq.s32.totalorder %s20, 0
      %p157 = por %p155, %p156
      %p158 = scmp.le.s32.totalorder 1, %s14
      %p159 = scmp.lt.s32.totalorder %s14, 3
      %p160 = pnand %p158, %p159
      %p161 = pneg %p160
      // Predicated region
      $region9: #{tpu_custom_call.1} parent=5 // pred_check
        _
      $region10: #{tpu_custom_call.1} parent=5 // pred_check_branch
        %163 = sbr.rel (%p160) target = $region12
      $region11: #{tpu_custom_call.1} parent=5 // pred_region
        %s164 = ssub.s32 %s14, 1
        // Predicated region
        $region13: #{tpu_custom_call.1} parent=11 // pred_check
          %p165 = pneg %p61
        $region14: #{tpu_custom_call.1} parent=11 // pred_check_branch
          %167 = sbr.rel (%p165) target = $region16
        $region15: #{tpu_custom_call.1} parent=11 // pred_region
          _
        $region16: #{tpu_custom_call.1} parent=11 // pred_fallthru
          _
        // Predicated region
        $region17: #{tpu_custom_call.1} parent=11 // pred_check
          %p168 = pneg %p82
        $region18: #{tpu_custom_call.1} parent=11 // pred_check_branch
          %170 = sbr.rel (%p168) target = $region20
        $region19: #{tpu_custom_call.1} parent=11 // pred_region
          _
        $region20: #{tpu_custom_call.1} parent=11 // pred_fallthru
          _
        // Predicated region
        $region21: #{tpu_custom_call.1} parent=11 // pred_check
          %p171 = pneg %p103
        $region22: #{tpu_custom_call.1} parent=11 // pred_check_branch
          %173 = sbr.rel (%p171) target = $region24
        $region23: #{tpu_custom_call.1} parent=11 // pred_region
          _
        $region24: #{tpu_custom_call.1} parent=11 // pred_fallthru
          _
        // Predicated region
        $region25: #{tpu_custom_call.1} parent=11 // pred_check
          %p174 = pneg %p124
        $region26: #{tpu_custom_call.1} parent=11 // pred_check_branch
          %176 = sbr.rel (%p174) target = $region28
        $region27: #{tpu_custom_call.1} parent=11 // pred_region
          _
        $region28: #{tpu_custom_call.1} parent=11 // pred_fallthru
          _
      $region12: #{tpu_custom_call.1} parent=5 // pred_fallthru
        _
      %p177 = scmp.lt.s32.totalorder %s14, 2
      // Predicated region
      $region29: #{tpu_custom_call.1} parent=5 // pred_check
        %p178 = pneg %p177
      $region30: #{tpu_custom_call.1} parent=5 // pred_check_branch
        %180 = sbr.rel (%p178) target = $region32
      $region31: #{tpu_custom_call.1} parent=5 // pred_region
        // Predicated region
        $region33: #{tpu_custom_call.1} parent=31 // pred_check
          %p181 = pneg %p34
        $region34: #{tpu_custom_call.1} parent=31 // pred_check_branch
          %183 = sbr.rel (%p181) target = $region36
        $region35: #{tpu_custom_call.1} parent=31 // pred_region
          %s184 = smul.u32 16, %s14
          %s185 = ssub.s32 25, %s184
          %p186 = scmp.lt.s32.totalorder %s185, 16
          %s187 = scalar_select %p186, %s185, 16
          %s188 = smul.u32 128, %s187
          %p189 = scmp.lt.s32.totalorder %s184, 24
          %s190 = scalar_select %p189, %s184, 24
          %s191 = smul.addr %s190, 8
          %s192 = scalar_lea.vmem %s0, %s191
          %s193 = smul.u32 16, %s14
          %s194 = ssub.s32 25, %s193
          %p195 = scmp.lt.s32.totalorder %s194, 16
          %s196 = scalar_select %p195, %s194, 16
          %s197 = smul.u32 128, %s196
        $region36: #{tpu_custom_call.1} parent=31 // pred_fallthru
          _
      $region32: #{tpu_custom_call.1} parent=5 // pred_fallthru
        _
      %p198 = scmp.le.s32.totalorder 1, %s14
      %p199 = scmp.lt.s32.totalorder %s14, 3
      %p200 = pnand %p198, %p199
      %p201 = pneg %p200
      // Predicated region
      $region37: #{tpu_custom_call.1} parent=5 // pred_check
        _
      $region38: #{tpu_custom_call.1} parent=5 // pred_check_branch
        %203 = sbr.rel (%p200) target = $region40
      $region39: #{tpu_custom_call.1} parent=5 // pred_region
        %s204 = ssub.s32 %s14, 1
        %s205 = smul.u32 16, %s19
        %s206 = ssub.s32 25, %s205
        %p207 = scmp.lt.s32.totalorder %s206, 16
        %s208 = scalar_select %p207, %s206, 16
        %s209 = smul.u32 128, %s208
        %p210 = scmp.lt.s32.totalorder %s205, 24
        %s211 = scalar_select %p210, %s205, 24
        %s212 = smul.addr %s211, 8
        %s213 = scalar_lea.vmem %s0, %s212
        %p214 = pneg %p40
        %p215 = pneg %p37
        %p216 = pneg %p61
        %p217 = pneg %p58
        %p218 = pneg %p82
        %p219 = pneg %p79
        %p220 = pneg %p103
        %p221 = pneg %p100
        %p222 = pneg %p124
        %p223 = pneg %p121
        %p224 = pneg %p150
        %p225 = pneg %p147
        %s226 = sand.u32 %s137, 1
        %s227 = scalar_lea.sflag [#allocation3], %s226
        %s228 = sand.u32 %s137, 1
        %s229 = smul.addr %s228, 8
        %s230 = scalar_lea.vmem [#allocation2], %s229
        %s231 = smul.u32 16, %s19
        %s232 = ssub.s32 25, %s231
        %p233 = scmp.lt.s32.totalorder %s232, 16
        %s234 = scalar_select %p233, %s232, 16
        %s235 = smul.u32 128, %s234
        %p236 = scmp.lt.s32.totalorder %s231, 24
        %s237 = scalar_select %p236, %s231, 24
        %s238 = smul.addr %s237, 8
        %s239 = scalar_lea.vmem %s0, %s238
        %s240 = smul.u32 16, %s19
        %s241 = ssub.s32 25, %s240
        %p242 = scmp.lt.s32.totalorder %s241, 16
        %s243 = scalar_select %p242, %s241, 16
        %s244 = smul.u32 128, %s243
        %v246 = vld [vmem:[%s239] sm:$0xff]
        %v247 = vld [vmem:[%s239 + $0x8] sm:$0xff]
        %v248 = vld [vmem:[%s239 + $0x10] sm:$0xff]
        %v249 = vld [vmem:[%s239 + $0x18] sm:$0xff]
        %v250 = vld [vmem:[%s239 + $0x20] sm:$0xff]
        %v251 = vld [vmem:[%s239 + $0x28] sm:$0xff]
        %v252 = vld [vmem:[%s239 + $0x30] sm:$0xff]
        %v253 = vld [vmem:[%s239 + $0x38] sm:$0xff]
        %v254 = vld [vmem:[%s239 + $0x40] sm:$0xff]
        %v255 = vld [vmem:[%s239 + $0x48] sm:$0xff]
        %v256 = vld [vmem:[%s239 + $0x50] sm:$0xff]
        %v257 = vld [vmem:[%s239 + $0x58] sm:$0xff]
        %v258 = vld [vmem:[%s239 + $0x60] sm:$0xff]
        %v259 = vld [vmem:[%s239 + $0x68] sm:$0xff]
        %v260 = vld [vmem:[%s239 + $0x70] sm:$0xff]
        %v261 = vld [vmem:[%s239 + $0x78] sm:$0xff]
        %v262 = vpack.c.bf16 %v247, %v246
        %v263 = vpack.c.bf16 %v249, %v248
        %v264 = vpack.c.bf16 %v251, %v250
        %v265 = vpack.c.bf16 %v253, %v252
        %v266 = vpack.c.bf16 %v255, %v254
        %v267 = vpack.c.bf16 %v257, %v256
        %v268 = vpack.c.bf16 %v259, %v258
        %v269 = vpack.c.bf16 %v261, %v260
        %v270 = vld [vmem:[%s1] sm:$0xf]
        %v271 = vld [vmem:[%s1 + $0x4] sm:$0xf]
        %v272 = vld [vmem:[%s1 + $0x8] sm:$0xf]
        %v273 = vld [vmem:[%s1 + $0xc] sm:$0xf]
        %v274 = vld [vmem:[%s1 + $0x10] sm:$0xf]
        %v275 = vld [vmem:[%s1 + $0x14] sm:$0xf]
        %v276 = vld [vmem:[%s1 + $0x18] sm:$0xf]
        %v277 = vld [vmem:[%s1 + $0x1c] sm:$0xf]
        %v278 = vld [vmem:[%s1 + $0x20] sm:$0xf]
        %v279 = vld [vmem:[%s1 + $0x24] sm:$0xf]
        %v280 = vld [vmem:[%s1 + $0x28] sm:$0xf]
        %v281 = vld [vmem:[%s1 + $0x2c] sm:$0xf]
        %v282 = vld [vmem:[%s1 + $0x30] sm:$0xf]
        %v283 = vld [vmem:[%s1 + $0x34] sm:$0xf]
        %v284 = vld [vmem:[%s1 + $0x38] sm:$0xf]
        %v285 = vld [vmem:[%s1 + $0x3c] sm:$0xf]
        %v286 = vld [vmem:[%s1 + $0x40] sm:$0xf]
        %v287 = vld [vmem:[%s1 + $0x44] sm:$0xf]
        %v288 = vld [vmem:[%s1 + $0x48] sm:$0xf]
        %v289 = vld [vmem:[%s1 + $0x4c] sm:$0xf]
        %v290 = vld [vmem:[%s1 + $0x50] sm:$0xf]
        %v291 = vld [vmem:[%s1 + $0x54] sm:$0xf]
        %v292 = vld [vmem:[%s1 + $0x58] sm:$0xf]
        %v293 = vld [vmem:[%s1 + $0x5c] sm:$0xf]
        %v294 = vld [vmem:[%s1 + $0x60] sm:$0xf]
        %v295 = vld [vmem:[%s1 + $0x64] sm:$0xf]
        %v296 = vld [vmem:[%s1 + $0x68] sm:$0xf]
        %v297 = vld [vmem:[%s1 + $0x6c] sm:$0xf]
        %v298 = vld [vmem:[%s1 + $0x70] sm:$0xf]
        %v299 = vld [vmem:[%s1 + $0x74] sm:$0xf]
        %v300 = vld [vmem:[%s1 + $0x78] sm:$0xf]
        %v301 = vld [vmem:[%s1 + $0x7c] sm:$0xf]
        %v302 = vld [vmem:[%s2] sm:$0x3]
        %v304 = vlaneseq
        %v305 = vshrl.u32 %v304, 7
        %v306 = vsub.s32 0, %v305
        %v307 = vrot.slane %v302, %v306
        %v308 = vlaneseq
        %v309 = vshrl.u32 %v308, 7
        %v310 = vsub.s32 1, %v309
        %v311 = vrot.slane %v302, %v310
        %v346 = vunpack.c.l.b16 %v270
        %v347 = vunpack.c.l.b16 %v271
        %v348 = vunpack.c.l.b16 %v272
        %v349 = vunpack.c.l.b16 %v273
        %v350 = vunpack.c.l.b16 %v274
        %v351 = vunpack.c.l.b16 %v275
        %v352 = vunpack.c.l.b16 %v276
        %v353 = vunpack.c.l.b16 %v277
        %v354 = vunpack.c.l.b16 %v278
        %v355 = vunpack.c.l.b16 %v279
        %v356 = vunpack.c.l.b16 %v280
        %v357 = vunpack.c.l.b16 %v281
        %v358 = vunpack.c.l.b16 %v282
        %v359 = vunpack.c.l.b16 %v283
        %v360 = vunpack.c.l.b16 %v284
        %v361 = vunpack.c.l.b16 %v285
        %v362 = vunpack.c.l.b16 %v286
        %v363 = vunpack.c.l.b16 %v287
        %v364 = vunpack.c.l.b16 %v288
        %v365 = vunpack.c.l.b16 %v289
        %v366 = vunpack.c.l.b16 %v290
        %v367 = vunpack.c.l.b16 %v291
        %v368 = vunpack.c.l.b16 %v292
        %v369 = vunpack.c.l.b16 %v293
        %v370 = vunpack.c.l.b16 %v294
        %v371 = vunpack.c.l.b16 %v295
        %v372 = vunpack.c.l.b16 %v296
        %v373 = vunpack.c.l.b16 %v297
        %v374 = vunpack.c.l.b16 %v298
        %v375 = vunpack.c.l.b16 %v299
        %v376 = vunpack.c.l.b16 %v300
        %v377 = vunpack.c.l.b16 %v301
        %v378 = vpack.c.b16 %v347, %v346
        %v379 = vpack.c.b16 %v349, %v348
        %v380 = vpack.c.b16 %v351, %v350
        %v381 = vpack.c.b16 %v353, %v352
        %v382 = vpack.c.b16 %v355, %v354
        %v383 = vpack.c.b16 %v357, %v356
        %v384 = vpack.c.b16 %v359, %v358
        %v385 = vpack.c.b16 %v361, %v360
        %v386 = vpack.c.b16 %v363, %v362
        %v387 = vpack.c.b16 %v365, %v364
        %v388 = vpack.c.b16 %v367, %v366
        %v389 = vpack.c.b16 %v369, %v368
        %v390 = vpack.c.b16 %v371, %v370
        %v391 = vpack.c.b16 %v373, %v372
        %v392 = vpack.c.b16 %v375, %v374
        %v393 = vpack.c.b16 %v377, %v376
        %vm394 = vcmask 523264
        %v396 = vsel %vm394, %v262, 0
        %v399 = vsel %vm394, %v263, 0
        %v402 = vsel %vm394, %v264, 0
        %v405 = vsel %vm394, %v265, 0
        %v408 = vsel %vm394, %v266, 0
        %v411 = vsel %vm394, %v267, 0
        %v414 = vsel %vm394, %v268, 0
        %v417 = vsel %vm394, %v269, 0
        %v420 = vsel %vm394, %v378, 0
        %v423 = vsel %vm394, %v379, 0
        %v426 = vsel %vm394, %v380, 0
        %v429 = vsel %vm394, %v381, 0
        %v432 = vsel %vm394, %v382, 0
        %v435 = vsel %vm394, %v383, 0
        %v438 = vsel %vm394, %v384, 0
        %v441 = vsel %vm394, %v385, 0
        %v444 = vsel %vm394, %v386, 0
        %v447 = vsel %vm394, %v387, 0
        %v450 = vsel %vm394, %v388, 0
        %v453 = vsel %vm394, %v389, 0
        %v456 = vsel %vm394, %v390, 0
        %v459 = vsel %vm394, %v391, 0
        %v462 = vsel %vm394, %v392, 0
        %v465 = vsel %vm394, %v393, 0
        %467 = vmatprep.subr.bf16.mxu0 0
        %468 = vmatpush1.bf16.xpose.msra.mxu0 %v420
        %469 = vmatprep.subr.bf16.mxu0 0
        %470 = vmatpush1.bf16.xpose.msra.mxu0 %v423
        %471 = vmatprep.subr.bf16.mxu0 0
        %472 = vmatpush1.bf16.xpose.msra.mxu0 %v426
        %473 = vmatprep.subr.bf16.mxu0 0
        %474 = vmatpush1.bf16.xpose.msra.mxu0 %v429
        %475 = vmatprep.subr.bf16.mxu0 0
        %476 = vmatpush1.bf16.xpose.msra.mxu0 %v432
        %477 = vmatprep.subr.bf16.mxu0 0
        %478 = vmatpush1.bf16.xpose.msra.mxu0 %v435
        %479 = vmatprep.subr.bf16.mxu0 0
        %480 = vmatpush1.bf16.xpose.msra.mxu0 %v438
        %481 = vmatprep.subr.bf16.mxu0 0
        %482 = vmatpush1.bf16.xpose.msra.mxu0 %v441
        %483 = vmatprep.subr.bf16.mxu0 0
        %484 = vmatpush1.bf16.xpose.msra.mxu0 %v444
        %485 = vmatprep.subr.bf16.mxu0 0
        %486 = vmatpush1.bf16.xpose.msra.mxu0 %v447
        %487 = vmatprep.subr.bf16.mxu0 0
        %488 = vmatpush1.bf16.xpose.msra.mxu0 %v450
        %489 = vmatprep.subr.bf16.mxu0 0
        %490 = vmatpush1.bf16.xpose.msra.mxu0 %v453
        %491 = vmatprep.subr.bf16.mxu0 0
        %492 = vmatpush1.bf16.xpose.msra.mxu0 %v456
        %493 = vmatprep.subr.bf16.mxu0 0
        %494 = vmatpush1.bf16.xpose.msra.mxu0 %v459
        %495 = vmatprep.subr.bf16.mxu0 0
        %496 = vmatpush1.bf16.xpose.msra.mxu0 %v462
        %497 = vmatprep.subr.bf16.mxu0 0
        %498 = vmatpush1.bf16.xpose.msra.mxu0 %v465
        %499 = vmatprep.mubr.bf16.mxu0 0
        %500 = vmatmul.mubr.bf16.gmra.mrb[0].mxu0 %v396
        %v501 = vpop.f32.mrb[0].mxu0
        %v502 = vadd.f32 %v307, %v501
        %v503 = vpop.f32.mrb[0].mxu0
        %v504 = vadd.f32 %v311, %v503
        %v505 = vpop.f32.mrb[0].mxu0
        %v506 = vadd.f32 %v307, %v505
        %v507 = vpop.f32.mrb[0].mxu0
        %v508 = vadd.f32 %v311, %v507
        %509 = vmatprep.mubr.bf16.mxu0 0
        %510 = vmatmul.mubr.bf16.gmra.mrb[0].mxu0 %v399
        %v511 = vpop.f32.mrb[0].mxu0
        %v512 = vadd.f32 %v307, %v511
        %v513 = vpop.f32.mrb[0].mxu0
        %v514 = vadd.f32 %v311, %v513
        %v515 = vpop.f32.mrb[0].mxu0
        %v516 = vadd.f32 %v307, %v515
        %v517 = vpop.f32.mrb[0].mxu0
        %v518 = vadd.f32 %v311, %v517
        %519 = vmatprep.mubr.bf16.mxu0 0
        %520 = vmatmul.mubr.bf16.gmra.mrb[0].mxu0 %v402
        %v521 = vpop.f32.mrb[0].mxu0
        %v522 = vadd.f32 %v307, %v521
        %v523 = vpop.f32.mrb[0].mxu0
        %v524 = vadd.f32 %v311, %v523
        %v525 = vpop.f32.mrb[0].mxu0
        %v526 = vadd.f32 %v307, %v525
        %v527 = vpop.f32.mrb[0].mxu0
        %v528 = vadd.f32 %v311, %v527
        %529 = vmatprep.mubr.bf16.mxu0 0
        %530 = vmatmul.mubr.bf16.gmra.mrb[0].mxu0 %v405
        %v531 = vpop.f32.mrb[0].mxu0
        %v532 = vadd.f32 %v307, %v531
        %v533 = vpop.f32.mrb[0].mxu0
        %v534 = vadd.f32 %v311, %v533
        %v535 = vpop.f32.mrb[0].mxu0
        %v536 = vadd.f32 %v307, %v535
        %v537 = vpop.f32.mrb[0].mxu0
        %v538 = vadd.f32 %v311, %v537
        %539 = vmatprep.mubr.bf16.mxu0 0
        %540 = vmatmul.mubr.bf16.gmra.mrb[0].mxu0 %v408
        %v541 = vpop.f32.mrb[0].mxu0
        %v542 = vadd.f32 %v307, %v541
        %v543 = vpop.f32.mrb[0].mxu0
        %v544 = vadd.f32 %v311, %v543
        %v545 = vpop.f32.mrb[0].mxu0
        %v546 = vadd.f32 %v307, %v545
        %v547 = vpop.f32.mrb[0].mxu0
        %v548 = vadd.f32 %v311, %v547
        %549 = vmatprep.mubr.bf16.mxu0 0
        %550 = vmatmul.mubr.bf16.gmra.mrb[0].mxu0 %v411
        %v551 = vpop.f32.mrb[0].mxu0
        %v552 = vadd.f32 %v307, %v551
        %v553 = vpop.f32.mrb[0].mxu0
        %v554 = vadd.f32 %v311, %v553
        %v555 = vpop.f32.mrb[0].mxu0
        %v556 = vadd.f32 %v307, %v555
        %v557 = vpop.f32.mrb[0].mxu0
        %v558 = vadd.f32 %v311, %v557
        %559 = vmatprep.mubr.bf16.mxu0 0
        %560 = vmatmul.mubr.bf16.gmra.mrb[0].mxu0 %v414
        %v561 = vpop.f32.mrb[0].mxu0
        %v562 = vadd.f32 %v307, %v561
        %v563 = vpop.f32.mrb[0].mxu0
        %v564 = vadd.f32 %v311, %v563
        %v565 = vpop.f32.mrb[0].mxu0
        %v566 = vadd.f32 %v307, %v565
        %v567 = vpop.f32.mrb[0].mxu0
        %v568 = vadd.f32 %v311, %v567
        %569 = vmatprep.mubr.bf16.mxu0 0
        %570 = vmatmul.mubr.bf16.gmra.mrb[0].mxu0 %v417
        %v571 = vpop.f32.mrb[0].mxu0
        %v572 = vadd.f32 %v307, %v571
        %v573 = vpop.f32.mrb[0].mxu0
        %v574 = vadd.f32 %v311, %v573
        %v575 = vpop.f32.mrb[0].mxu0
        %v576 = vadd.f32 %v307, %v575
        %v577 = vpop.f32.mrb[0].mxu0
        %v578 = vadd.f32 %v311, %v577
        %579 = vdwg.mxu0
        %v580 = vmax.f32 %v502, 0.0
        %v581 = vmax.f32 %v504, 0.0
        %v582 = vmax.f32 %v506, 0.0
        %v583 = vmax.f32 %v508, 0.0
        %v584 = vmax.f32 %v512, 0.0
        %v585 = vmax.f32 %v514, 0.0
        %v586 = vmax.f32 %v516, 0.0
        %v587 = vmax.f32 %v518, 0.0
        %v588 = vmax.f32 %v522, 0.0
        %v589 = vmax.f32 %v524, 0.0
        %v590 = vmax.f32 %v526, 0.0
        %v591 = vmax.f32 %v528, 0.0
        %v592 = vmax.f32 %v532, 0.0
        %v593 = vmax.f32 %v534, 0.0
        %v594 = vmax.f32 %v536, 0.0
        %v595 = vmax.f32 %v538, 0.0
        %v596 = vmax.f32 %v542, 0.0
        %v597 = vmax.f32 %v544, 0.0
        %v598 = vmax.f32 %v546, 0.0
        %v599 = vmax.f32 %v548, 0.0
        %v600 = vmax.f32 %v552, 0.0
        %v601 = vmax.f32 %v554, 0.0
        %v602 = vmax.f32 %v556, 0.0
        %v603 = vmax.f32 %v558, 0.0
        %v604 = vmax.f32 %v562, 0.0
        %v605 = vmax.f32 %v564, 0.0
        %v606 = vmax.f32 %v566, 0.0
        %v607 = vmax.f32 %v568, 0.0
        %v608 = vmax.f32 %v572, 0.0
        %v609 = vmax.f32 %v574, 0.0
        %v610 = vmax.f32 %v576, 0.0
        %v611 = vmax.f32 %v578, 0.0
        %v612 = vld [vmem:[%s3] sm:$0xff]
        %v613 = vpack.c.bf16 %v582, %v580
        %v614 = vpack.c.bf16 %v583, %v581
        %v615 = vpack.c.bf16 %v586, %v584
        %v616 = vpack.c.bf16 %v587, %v585
        %v617 = vpack.c.bf16 %v590, %v588
        %v618 = vpack.c.bf16 %v591, %v589
        %v619 = vpack.c.bf16 %v594, %v592
        %v620 = vpack.c.bf16 %v595, %v593
        %v621 = vpack.c.bf16 %v598, %v596
        %v622 = vpack.c.bf16 %v599, %v597
        %v623 = vpack.c.bf16 %v602, %v600
        %v624 = vpack.c.bf16 %v603, %v601
        %v625 = vpack.c.bf16 %v606, %v604
        %v626 = vpack.c.bf16 %v607, %v605
        %v627 = vpack.c.bf16 %v610, %v608
        %v628 = vpack.c.bf16 %v611, %v609
        %v629 = vld [vmem:[%s4] sm:$0xff]
        %631 = vset.pattern.permute.xlu0 0
        %632 = vperm.xlu0 %631, %v629
        %v633 = vpop.permute.xlu0 %632
        %v636 = vunpack.c.l.b16 %v612
        %v637 = vunpack.c.h.b16 %v612
        %v638 = vpack.c.b16 %v636, %v636
        %v639 = vpack.c.b16 %v637, %v637
        %642 = vmatprep.subr.bf16.mxu0 %v614
        %643 = vmatpush1.bf16.xpose.msra.mxu0 %v613
        %644 = vmatprep.subr.bf16.mxu0 %v616
        %645 = vmatpush1.bf16.xpose.msra.mxu0 %v615
        %646 = vmatprep.subr.bf16.mxu0 %v618
        %647 = vmatpush1.bf16.xpose.msra.mxu0 %v617
        %648 = vmatprep.subr.bf16.mxu0 %v620
        %649 = vmatpush1.bf16.xpose.msra.mxu0 %v619
        %650 = vmatprep.subr.bf16.mxu0 %v622
        %651 = vmatpush1.bf16.xpose.msra.mxu0 %v621
        %652 = vmatprep.subr.bf16.mxu0 %v624
        %653 = vmatpush1.bf16.xpose.msra.mxu0 %v623
        %654 = vmatprep.subr.bf16.mxu0 %v626
        %655 = vmatpush1.bf16.xpose.msra.mxu0 %v625
        %656 = vmatprep.subr.bf16.mxu0 %v628
        %657 = vmatpush1.bf16.xpose.msra.mxu0 %v627
        %658 = vmatprep.subr.bf16.mxu0 0
        %659 = vmatpush1.bf16.xpose.msra.mxu0 0
        %660 = vmatprep.subr.bf16.mxu0 0
        %661 = vmatpush1.bf16.xpose.msra.mxu0 0
        %662 = vmatprep.subr.bf16.mxu0 0
        %663 = vmatpush1.bf16.xpose.msra.mxu0 0
        %664 = vmatprep.subr.bf16.mxu0 0
        %665 = vmatpush1.bf16.xpose.msra.mxu0 0
        %666 = vmatprep.subr.bf16.mxu0 0
        %667 = vmatpush1.bf16.xpose.msra.mxu0 0
        %668 = vmatprep.subr.bf16.mxu0 0
        %669 = vmatpush1.bf16.xpose.msra.mxu0 0
        %670 = vmatprep.subr.bf16.mxu0 0
        %671 = vmatpush1.bf16.xpose.msra.mxu0 0
        %672 = vmatprep.subr.bf16.mxu0 0
        %673 = vmatpush1.bf16.xpose.msra.mxu0 0
        %674 = vmatprep.mubr.bf16.mxu0 %v639
        %675 = vmatmul.mubr.bf16.gmra.mrb[0].mxu0 %v638
        %v676 = vpop.f32.mrb[0].mxu0
        %v677 = vadd.f32 %v633, %v676
        %v678 = vpop.f32.mrb[0].mxu0
        %v679 = vpop.f32.mrb[0].mxu0
        %v680 = vpop.f32.mrb[0].mxu0
        %681 = vdwg.mxu0
        %682 = vst [vmem:[%s230] sm:$0xff] %v677
        %s683 = sand.u32 %s137, 1
        %s684 = scalar_lea.sflag [#allocation3], %s683
        %s685 = sand.u32 %s137, 1
        %s686 = smul.addr %s685, 8
        %s687 = scalar_lea.vmem [#allocation2], %s686
        // Predicated region
        $region41: #{tpu_custom_call.1} parent=39 // pred_check
          %p688 = pneg %p147
        $region42: #{tpu_custom_call.1} parent=39 // pred_check_branch
          %690 = sbr.rel (%p688) target = $region44
        $region43: #{tpu_custom_call.1} parent=39 // pred_region
          %s692 = ssub.s32 128, 128
          %693 = vsyncadd %s684, %s692
          %s694 = smul.addr %s19, 128
          %s695 = scalar_lea.hbm %s5, %s694
          %s697 = sshll.u32 %s687, 4
          %s698 = int_to_ptr.vmem [resolvable:$true] %s697
          %700 = dma.vmem_to_hbm [thread:$0]  %s698, 128, %s695, %s684
        $region44: #{tpu_custom_call.1} parent=39 // pred_fallthru
          _
      $region40: #{tpu_custom_call.1} parent=5 // pred_fallthru
        _
      %p701 = scmp.le.s32.totalorder 2, %s14
      // Predicated region
      $region45: #{tpu_custom_call.1} parent=5 // pred_check
        %p702 = pneg %p701
      $region46: #{tpu_custom_call.1} parent=5 // pred_check_branch
        %704 = sbr.rel (%p702) target = $region48
      $region47: #{tpu_custom_call.1} parent=5 // pred_region
        %s705 = ssub.s32 %s14, 2
        // Predicated region
        $region49: #{tpu_custom_call.1} parent=47 // pred_check
          %p706 = pneg %p153
        $region50: #{tpu_custom_call.1} parent=47 // pred_check_branch
          %708 = sbr.rel (%p706) target = $region52
        $region51: #{tpu_custom_call.1} parent=47 // pred_region
          %s709 = sand.u32 %s138, 1
          %s710 = scalar_lea.sflag [#allocation3], %s709
          %s711 = sand.u32 %s138, 1
          %s712 = smul.addr %s711, 8
          %s713 = scalar_lea.vmem [#allocation2], %s712
          %714 = dma.done %s710, 128
        $region52: #{tpu_custom_call.1} parent=47 // pred_fallthru
          _
      $region48: #{tpu_custom_call.1} parent=5 // pred_fallthru
        _
    $region6: #{tpu_custom_call.1} parent=1 // loop_footer
      %s18 = sadd.s32 1, %s14
    $region7: #{tpu_custom_call.1} parent=1 // loop_footer_branch
      %13 = sbr.rel target = $region3
    $region8: #{tpu_custom_call.1} parent=1 // loop_exit
      _
    %715 = vsyncpa [#allocation3], 1
    %s716 = scalar_lea.sflag [#allocation3], 1
    %717 = vsyncpa %s716, 1

</llo_original>
